<compile_context>
chip_gen: v5e
topology: v5e:2x2
jax: 0.10.0
libtpu: 0.0.40
codegen_flags: <defaults>
</compile_context>

<pallas_src>
import jax
import jax.numpy as jnp
from jax.experimental import pallas as pl
from jax.experimental.pallas import tpu as pltpu


# ---------------------------------------------------------------------------
# Kernel
# ---------------------------------------------------------------------------
def _mil_pooled_kernel(x_ref, wc_ref, bc_ref, o_ref, acc_ref):
    """x_ref: (TB, TN, L) f32 tile.  Accumulate sum over instances into acc_ref
    (TB, L) f32; at the last instance step apply the classifier and store one
    lane-dense (1, TB, C_pad) slab."""
    n = pl.program_id(1)

    @pl.when(n == 0)
    def _():
        acc_ref[...] = jnp.zeros_like(acc_ref)

    # Partial instance sum for this tile, accumulated in f32 (no full-tile upcast copy).
    acc_ref[...] += jnp.sum(x_ref[...], axis=1, dtype=jnp.float32)

    @pl.when(n == pl.num_programs(1) - 1)
    def _():
        y = jnp.dot(acc_ref[...], wc_ref[...],
                    preferred_element_type=jnp.float32) + bc_ref[...]   # (TB, C_pad)
        o_ref[...] = y[None]


# ---------------------------------------------------------------------------
# Tiling policy
# ---------------------------------------------------------------------------
def _round_up(a, b):
    return (a + b - 1) // b * b


def _num_tensorcores():
    try:
        kind = jax.devices()[0].device_kind.lower()
        if "v7" in kind:           # v7x: 2 TensorCores per chip (megacore)
            return 2
    except Exception:
        pass
    return 1


def _vmem_budget():
    """(vmem_limit_bytes, per-x-buffer byte budget), derived from chip VMEM."""
    try:
        cap = int(pltpu.get_tpu_info().vmem_capacity_bytes)
    except Exception:
        cap = 64 * 1024 * 1024     # conservative default (v7x per-TC VMEM)
    vmem_limit = int(min(cap * 3 // 4, 100 * 1024 * 1024))   # 96 MiB on v5e/v6e, 48 MiB on v7x
    x_buf_budget = vmem_limit // 4   # 2 pipeline buffers + headroom for weights/acc/out
    return vmem_limit, x_buf_budget


def _choose_tiles(B, N, L, itemsize, x_buf_budget, num_tc):
    """Pick (TB bags, TN instances) per grid step, budgeting *padded* VMEM bytes:
    last dim padded to 128 lanes, second-to-last to 8 sublanes (f32)."""
    sub = 8
    l_pad = _round_up(L, 128)
    bag_bytes = _round_up(N, sub) * l_pad * itemsize     # one whole (padded) bag
    if bag_bytes <= x_buf_budget:
        tn = N                                           # full bag per step
        tb = max(1, min(B, x_buf_budget // bag_bytes))
    else:
        tb = 1                                           # stream the instance axis
        tn = max(sub, (x_buf_budget // (l_pad * itemsize)) // sub * sub)
        tn = min(tn, _round_up(N, sub))
    # Keep at least one bag tile per TensorCore on multi-TC chips (v7x megacore).
    if num_tc > 1 and B >= num_tc and pl.cdiv(B, tb) < num_tc:
        tb = pl.cdiv(B, num_tc)
    return tb, tn


# ---------------------------------------------------------------------------
# Wrapper
# ---------------------------------------------------------------------------
def gated_attention_mil(x, params, *, max_x_buffer_bytes=None):
    """Forward pass of GatedAttentionMIL.  `params` = (wv, bv, wu, bu, wa, ba, wc, bc)
    with Linear weights stored input-major (in_features, out_features).  The gated
    attention parameters are accepted for interface parity but — because torch's
    softmax runs over the singleton K axis — they provably do not influence the output."""
    _wv, _bv, _wu, _bu, _wa, _ba, wc, bc = params
    B, N, L = x.shape
    C = wc.shape[1]

    x = x.astype(jnp.float32)
    wc = wc.astype(jnp.float32)
    bc = jnp.reshape(bc, (1, -1)).astype(jnp.float32)

    vmem_limit, x_buf_budget = _vmem_budget()
    if max_x_buffer_bytes is not None:
        x_buf_budget = int(max_x_buffer_bytes)

    TB, TN = _choose_tiles(B, N, L, 4, x_buf_budget, _num_tensorcores())
    Gb = pl.cdiv(B, TB)
    Gn = pl.cdiv(N, TN)
    B_pad, N_pad = Gb * TB, Gn * TN

    # Zero-pad awkward batch / instance counts (zeros add nothing to the pooled sum;
    # padded bags are sliced off below).
    if (B_pad, N_pad) != (B, N):
        x = jnp.pad(x, ((0, B_pad - B), (0, N_pad - N), (0, 0)))

    # Lane-dense output: pad classifier columns to a multiple of 128.
    C_pad = _round_up(C, 128)
    wc_p = jnp.pad(wc, ((0, 0), (0, C_pad - C)))
    bc_p = jnp.pad(bc, ((0, 0), (0, C_pad - C)))

    grid_spec = pltpu.PrefetchScalarGridSpec(
        num_scalar_prefetch=0,
        grid=(Gb, Gn),
        in_specs=[
            pl.BlockSpec((TB, TN, L), lambda b, n: (b, n, 0)),     # streamed x tile
            pl.BlockSpec((L, C_pad), lambda b, n: (0, 0)),         # resident W_cls
            pl.BlockSpec((1, C_pad), lambda b, n: (0, 0)),         # resident b_cls
        ],
        out_specs=pl.BlockSpec((1, TB, C_pad), lambda b, n: (b, 0, 0)),
        scratch_shapes=[pltpu.VMEM((TB, L), jnp.float32)],
    )

    out = pl.pallas_call(
        _mil_pooled_kernel,
        out_shape=jax.ShapeDtypeStruct((Gb, TB, C_pad), jnp.float32),
        grid_spec=grid_spec,
        compiler_params=pltpu.CompilerParams(
            dimension_semantics=("parallel", "arbitrary"),
            vmem_limit_bytes=vmem_limit,
        ),
    )(x, wc_p, bc_p)

    # torch forward returns probs.squeeze(1) -> (B, C)
    return out.reshape(B_pad, C_pad)[:B, :C]


# ---------------------------------------------------------------------------
# Plain-JAX reference (replicates the PyTorch forward, including the softmax quirk)
# ---------------------------------------------------------------------------
def reference(x, params):
    wv, bv, wu, bu, wa, ba, wc, bc = params
    H = x
    A_V = jnp.tanh(H @ wv + bv)
    A_U = jax.nn.sigmoid(H @ wu + bu)
    A = (A_V * A_U) @ wa.T + ba                 # (B, N, 1)
    A = jnp.swapaxes(A, 2, 1)                   # (B, K, N)
    A = jax.nn.softmax(A, axis=1)               # softmax over K (size 1), as in torch
    M = A @ H                                   # (B, 1, L)
    Y = M @ wc + bc                             # (B, 1, C)
    return Y[:, 0, :]


def make_params(key, L, D, C):
    ks = jax.random.split(key, 8)
    wv = jax.random.normal(ks[0], (L, D), jnp.float32) * 0.1
    bv = jax.random.normal(ks[1], (1, D), jnp.float32) * 0.01
    wu = jax.random.normal(ks[2], (L, D), jnp.float32) * 0.1
    bu = jax.random.normal(ks[3], (1, D), jnp.float32) * 0.01
    wa = jax.random.normal(ks[4], (1, D), jnp.float32) * 0.1    # (K=1, D) as in torch
    ba = jax.random.normal(ks[5], (1, 1), jnp.float32) * 0.01
    wc = jax.random.normal(ks[6], (L, C), jnp.float32) * 0.1
    bc = jax.random.normal(ks[7], (1, C), jnp.float32) * 0.01
    return (wv, bv, wu, bu, wa, ba, wc, bc)


if __name__ == "__main__":
    # Deliberately awkward small shapes: B not a power of two, N not a multiple of 8,
    # so both the batch padding and the instance-axis streaming paths are exercised.
    B, N, L = 5, 19, 32      # bags, instances per bag, input_dim
    D, C = 128, 4            # attention hidden dim (fixed by the module), num_classes

    key = jax.random.PRNGKey(0)
    kx, kp = jax.random.split(key)
    x = jax.random.normal(kx, (B, N, L), jnp.float32)
    params = make_params(kp, L, D, C)

    y_ref = jax.block_until_ready(reference(x, params))

    # Default path: big tiles, whole bags per grid step.
    y_fast = jax.block_until_ready(gated_attention_mil(x, params))
    assert y_fast.shape == (B, C)
    assert jnp.allclose(y_fast, y_ref, rtol=2e-2, atol=3e-2), (y_fast, y_ref)

    # Forced-small-tile path: exercises the instance-axis grid + VMEM accumulator
    # (the same code path used for realistic large-N*L MIL bags).
    y_stream = jax.block_until_ready(
        gated_attention_mil(x, params, max_x_buffer_bytes=4096))
    assert y_stream.shape == (B, C)
    assert jnp.allclose(y_stream, y_ref, rtol=2e-2, atol=3e-2), (y_stream, y_ref)

    print("KERNEL_OK")
</pallas_src>

<mosaic_0001>
module attributes {stable_mosaic.version = 11 : i64} {
  func.func @_mil_pooled_kernel(%arg0: i32, %arg1: i32, %arg2: memref<5x19x32xf32, #tpu.memory_space<vmem>>, %arg3: memref<32x128xf32, #tpu.memory_space<vmem>>, %arg4: memref<1x128xf32, #tpu.memory_space<vmem>>, %arg5: memref<1x5x128xf32, #tpu.memory_space<vmem>>, %arg6: memref<5x32xf32, #tpu.memory_space<vmem>>) attributes {dimension_semantics = [#tpu.dimension_semantics<parallel>, #tpu.dimension_semantics<arbitrary>], iteration_bounds = array<i64: 1, 1>, scalar_prefetch = 0 : i64, scratch_operands = 1 : i64, tpu.core_type = #tpu.core_type<tc>, window_params = [{transform_indices = @transform_0, window_bounds = array<i64: 5, 19, 32>}, {pipeline_mode = #tpu.pipeline_mode<synchronous>, transform_indices = @transform_1, window_bounds = array<i64: 32, 128>}, {pipeline_mode = #tpu.pipeline_mode<synchronous>, transform_indices = @transform_2, window_bounds = array<i64: 1, 128>}, {transform_indices = @transform_3, window_bounds = array<i64: 1, 5, 128>}]} {
    %c0_i32 = arith.constant 0 : i32
    %0 = arith.cmpi eq, %arg1, %c0_i32 : i32
    %1 = arith.extui %0 : i1 to i32
    %c0_i32_0 = arith.constant 0 : i32
    %2 = arith.cmpi ne, %1, %c0_i32_0 : i32
    scf.if %2 {
      %cst_9 = arith.constant 0.000000e+00 : f32
      %11 = vector.broadcast %cst_9 : f32 to vector<5x32xf32>
      %c0_10 = arith.constant 0 : index
      %c0_11 = arith.constant 0 : index
      %12 = vector.load %arg6[%c0_10, %c0_11] : memref<5x32xf32, #tpu.memory_space<vmem>>, vector<5x32xf32>
      tpu.vector_store %arg6[%c0_10, %c0_11], %11 {strides = array<i32>} : memref<5x32xf32, #tpu.memory_space<vmem>>, vector<5x32xf32>,
    } else {
    }
    %c0 = arith.constant 0 : index
    %c0_1 = arith.constant 0 : index
    %3 = vector.load %arg6[%c0, %c0_1] : memref<5x32xf32, #tpu.memory_space<vmem>>, vector<5x32xf32>
    %c0_2 = arith.constant 0 : index
    %c0_3 = arith.constant 0 : index
    %c0_4 = arith.constant 0 : index
    %4 = vector.load %arg2[%c0_2, %c0_3, %c0_4] : memref<5x19x32xf32, #tpu.memory_space<vmem>>, vector<5x19x32xf32>
    %cst = arith.constant dense<0.000000e+00> : vector<5x32xf32>
    %5 = vector.multi_reduction <add>, %4, %cst [1] : vector<5x19x32xf32> to vector<5x32xf32>
    %6 = arith.addf %3, %5 : vector<5x32xf32>
    %c0_5 = arith.constant 0 : index
    %c0_6 = arith.constant 0 : index
    %7 = vector.load %arg6[%c0_5, %c0_6] : memref<5x32xf32, #tpu.memory_space<vmem>>, vector<5x32xf32>
    tpu.vector_store %arg6[%c0_5, %c0_6], %6 {strides = array<i32>} : memref<5x32xf32, #tpu.memory_space<vmem>>, vector<5x32xf32>,
    %c0_i32_7 = arith.constant 0 : i32
    %8 = arith.cmpi eq, %arg1, %c0_i32_7 : i32
    %9 = arith.extui %8 : i1 to i32
    %c0_i32_8 = arith.constant 0 : i32
    %10 = arith.cmpi ne, %9, %c0_i32_8 : i32
    scf.if %10 {
      %c0_9 = arith.constant 0 : index
      %c0_10 = arith.constant 0 : index
      %11 = vector.load %arg6[%c0_9, %c0_10] : memref<5x32xf32, #tpu.memory_space<vmem>>, vector<5x32xf32>
      %c0_11 = arith.constant 0 : index
      %c0_12 = arith.constant 0 : index
      %12 = vector.load %arg3[%c0_11, %c0_12] : memref<32x128xf32, #tpu.memory_space<vmem>>, vector<32x128xf32>
      %cst_13 = arith.constant dense<0.000000e+00> : vector<5x128xf32>
      %13 = tpu.matmul %11, %12, %cst_13 {dimension_numbers = #tpu.dot_dimension_numbers<[1], [0], [0], [1], [0, 0, 1, 1], [], []>} : vector<5x32xf32>, vector<32x128xf32>, vector<5x128xf32> -> vector<5x128xf32>
      %c0_14 = arith.constant 0 : index
      %c0_15 = arith.constant 0 : index
      %14 = vector.load %arg4[%c0_14, %c0_15] : memref<1x128xf32, #tpu.memory_space<vmem>>, vector<1x128xf32>
      %15 = vector.broadcast %14 : vector<1x128xf32> to vector<5x128xf32>
      %16 = arith.addf %13, %15 : vector<5x128xf32>
      %17 = vector.shape_cast %16 : vector<5x128xf32> to vector<1x5x128xf32>
      %c0_16 = arith.constant 0 : index
      %c0_17 = arith.constant 0 : index
      %c0_18 = arith.constant 0 : index
      %18 = vector.load %arg5[%c0_16, %c0_17, %c0_18] : memref<1x5x128xf32, #tpu.memory_space<vmem>>, vector<1x5x128xf32>
      tpu.vector_store %arg5[%c0_16, %c0_17, %c0_18], %17 {strides = array<i32>} : memref<1x5x128xf32, #tpu.memory_space<vmem>>, vector<1x5x128xf32>,
    } else {
    }
    return
  }
  func.func @transform_0(%arg0: i32, %arg1: i32) -> (i32, i32, i32) {
    %c0_i32 = arith.constant 0 : i32
    %c0_i32_0 = arith.constant 0 : i32
    return %arg0, %arg1, %c0_i32 : i32, i32, i32
  }
  func.func @transform_1(%arg0: i32, %arg1: i32) -> (i32, i32) {
    %c0_i32 = arith.constant 0 : i32
    %c0_i32_0 = arith.constant 0 : i32
    %c0_i32_1 = arith.constant 0 : i32
    return %c0_i32, %c0_i32_0 : i32, i32
  }
  func.func @transform_2(%arg0: i32, %arg1: i32) -> (i32, i32) {
    %c0_i32 = arith.constant 0 : i32
    %c0_i32_0 = arith.constant 0 : i32
    %c0_i32_1 = arith.constant 0 : i32
    return %c0_i32, %c0_i32_0 : i32, i32
  }
  func.func @transform_3(%arg0: i32, %arg1: i32) -> (i32, i32, i32) {
    %c0_i32 = arith.constant 0 : i32
    %c0_i32_0 = arith.constant 0 : i32
    %c0_i32_1 = arith.constant 0 : i32
    return %arg0, %c0_i32, %c0_i32_0 : i32, i32, i32
  }
}

</mosaic_0001>

<llo_original>
// kernel: tpu_custom_call.1
$region0: #{tpu_custom_call.1}
  #allocation0 [shape = 'u32[]', space=smem, size = 0x4, offset = 0x4, fixed_abs, tag = 'smem constant byte address 0x4 - core index']
  #allocation1 [shape = 'u32[72,128]{1,0:T(1,128)}', space=vmem, size = 0x9000, scoped, tag = 'internal scratch']
  #allocation2 [shape = 'f32[5,32]{1,0:T(8,128)}', space=vmem, size = 0x1000, scoped, tag = 'scratch operand']
  %s0 = inlined_call_operand.hbm [shape: f32[5,19,32], index: 0, kind: input, shape index: {}]
  %s1 = inlined_call_operand.hbm [shape: f32[32,128], index: 1, kind: input, shape index: {}]
  %s2 = inlined_call_operand.vmem [shape: f32[1,128], index: 2, kind: input, shape index: {}]
  %s3 = inlined_call_operand.vmem [shape: f32[1,5,128], index: 3, kind: output, shape index: {}]
  %s4 = sld [smem:[#allocation0]]
  $region38: #{tpu_custom_call.1} parent=0
    _
  %s6 = ssub.s32 1, %s4
  %s7 = scalar_select 0, %s6, %s4
  $region1: #{tpu_custom_call.1} parent=0
    #allocation3 [shape = 'u8[61440]{0}', space=vmem, size = 0xf000, scoped, tag = 'input window, operand 0, single buffered']
    #allocation4 [shape = 's32[1]{0}', space=sflag, size = 0x4, scoped, tag = 'scoped memory for tpu_custom_call.1']
    #allocation5 [shape = 'u8[16384]{0}', space=vmem, size = 0x4000, scoped, tag = 'input window, operand 1, single buffered']
    #allocation6 [shape = 's32[1]{0}', space=sflag, size = 0x4, scoped, tag = 'scoped memory for tpu_custom_call.1']
    %8 = vsyncpa [#allocation4], 0
    %9 = vsyncpa [#allocation6], 0
    // Predicated region
    $region2: #{tpu_custom_call.1} parent=1 // pred_check
      _
    $region3: #{tpu_custom_call.1} parent=1 // pred_check_branch
      %11 = sbr.rel (0) target = $region5
    $region4: #{tpu_custom_call.1} parent=1 // pred_region
      %13 = vsyncadd [#allocation4], 0
      %s14 = sshll.u32 %s0, 4
      %s15 = int_to_ptr.hbm [resolvable:$true] %s14
      %s16 = sshll.u32 [#allocation3], 4
      %s17 = int_to_ptr.vmem [resolvable:$true] %s16
      %22 = dma.hbm_to_vmem [thread:$0]  %s15, 1920, %s17, [#allocation4], 128, 128, 8
    $region5: #{tpu_custom_call.1} parent=1 // pred_fallthru
      _
    // Predicated region
    $region6: #{tpu_custom_call.1} parent=1 // pred_check
      _
    $region7: #{tpu_custom_call.1} parent=1 // pred_check_branch
      %24 = sbr.rel (0) target = $region9
    $region8: #{tpu_custom_call.1} parent=1 // pred_region
      %26 = vsyncadd [#allocation6], 0
      %s27 = sshll.u32 %s1, 4
      %s28 = int_to_ptr.hbm [resolvable:$true] %s27
      %s29 = sshll.u32 [#allocation5], 4
      %s30 = int_to_ptr.vmem [resolvable:$true] %s29
      %35 = dma.hbm_to_vmem [thread:$0]  %s28, 512, %s30, [#allocation6], 128, 128, 8
    $region9: #{tpu_custom_call.1} parent=1 // pred_fallthru
      _
    // Predicated region
    $region10: #{tpu_custom_call.1} parent=1 // pred_check
      _
    $region11: #{tpu_custom_call.1} parent=1 // pred_check_branch
      %37 = sbr.rel (0) target = $region13
    $region12: #{tpu_custom_call.1} parent=1 // pred_region
      _
    $region13: #{tpu_custom_call.1} parent=1 // pred_fallthru
      _
    // Predicated region
    $region14: #{tpu_custom_call.1} parent=1 // pred_check
      _
    $region15: #{tpu_custom_call.1} parent=1 // pred_check_branch
      %39 = sbr.rel (0) target = $region17
    $region16: #{tpu_custom_call.1} parent=1 // pred_region
      %41 = dma.done [#allocation4], 1920
    $region17: #{tpu_custom_call.1} parent=1 // pred_fallthru
      _
    // Predicated region
    $region18: #{tpu_custom_call.1} parent=1 // pred_check
      _
    $region19: #{tpu_custom_call.1} parent=1 // pred_check_branch
      %43 = sbr.rel (0) target = $region21
    $region20: #{tpu_custom_call.1} parent=1 // pred_region
      %45 = dma.done [#allocation6], 512
    $region21: #{tpu_custom_call.1} parent=1 // pred_fallthru
      _
    %p46 = scmp.eq.s32.totalorder 0, 0
    // Predicated region
    $region22: #{tpu_custom_call.1} parent=1 // pred_check
      %p47 = pneg %p46
    $region23: #{tpu_custom_call.1} parent=1 // pred_check_branch
      %49 = sbr.rel (%p47) target = $region25
    $region24: #{tpu_custom_call.1} parent=1 // pred_region
      %vm50 = vcmask 258048
      %51 = vst.msk [vmem:[#allocation2] sm:$0x1f] %vm50, 0.0
    $region25: #{tpu_custom_call.1} parent=1 // pred_fallthru
      _
    %v52 = vld [vmem:[#allocation2] sm:$0x1f]
    %v53 = vld [vmem:[#allocation3] sm:$0xff]
    %v54 = vld [vmem:[#allocation3 + $0x8] sm:$0xff]
    %v55 = vld [vmem:[#allocation3 + $0x10] sm:$0x7]
    %v56 = vld [vmem:[#allocation3 + $0x18] sm:$0xff]
    %v57 = vld [vmem:[#allocation3 + $0x20] sm:$0xff]
    %v58 = vld [vmem:[#allocation3 + $0x28] sm:$0x7]
    %v59 = vld [vmem:[#allocation3 + $0x30] sm:$0xff]
    %v60 = vld [vmem:[#allocation3 + $0x38] sm:$0xff]
    %v61 = vld [vmem:[#allocation3 + $0x40] sm:$0x7]
    %v62 = vld [vmem:[#allocation3 + $0x48] sm:$0xff]
    %v63 = vld [vmem:[#allocation3 + $0x50] sm:$0xff]
    %v64 = vld [vmem:[#allocation3 + $0x58] sm:$0x7]
    %v65 = vld [vmem:[#allocation3 + $0x60] sm:$0xff]
    %v66 = vld [vmem:[#allocation3 + $0x68] sm:$0xff]
    %v67 = vld [vmem:[#allocation3 + $0x70] sm:$0x7]
    %vm68 = vcmask 261120
    %v69 = vsel %vm68, %v53, 0.0
    %v70 = vsel %vm68, %v54, 0.0
    %v71 = vadd.f32 %v69, %v70
    %vm72 = vcmask 256000
    %v73 = vsel %vm72, %v55, 0.0
    %v74 = vadd.f32 %v71, %v73
    %v75 = vrot.slane %v74, 4
    %v76 = vadd.f32 %v74, %v75
    %v77 = vrot.slane %v76, 2
    %v78 = vadd.f32 %v76, %v77
    %v79 = vrot.slane %v78, 1
    %v80 = vadd.f32 %v78, %v79
    %v81 = vsel %vm68, %v56, 0.0
    %v82 = vsel %vm68, %v57, 0.0
    %v83 = vadd.f32 %v81, %v82
    %v84 = vsel %vm72, %v58, 0.0
    %v85 = vadd.f32 %v83, %v84
    %v86 = vrot.slane %v85, 4
    %v87 = vadd.f32 %v85, %v86
    %v88 = vrot.slane %v87, 2
    %v89 = vadd.f32 %v87, %v88
    %v90 = vrot.slane %v89, 1
    %v91 = vadd.f32 %v89, %v90
    %v92 = vsel %vm68, %v59, 0.0
    %v93 = vsel %vm68, %v60, 0.0
    %v94 = vadd.f32 %v92, %v93
    %v95 = vsel %vm72, %v61, 0.0
    %v96 = vadd.f32 %v94, %v95
    %v97 = vrot.slane %v96, 4
    %v98 = vadd.f32 %v96, %v97
    %v99 = vrot.slane %v98, 2
    %v100 = vadd.f32 %v98, %v99
    %v101 = vrot.slane %v100, 1
    %v102 = vadd.f32 %v100, %v101
    %v103 = vsel %vm68, %v62, 0.0
    %v104 = vsel %vm68, %v63, 0.0
    %v105 = vadd.f32 %v103, %v104
    %v106 = vsel %vm72, %v64, 0.0
    %v107 = vadd.f32 %v105, %v106
    %v108 = vrot.slane %v107, 4
    %v109 = vadd.f32 %v107, %v108
    %v110 = vrot.slane %v109, 2
    %v111 = vadd.f32 %v109, %v110
    %v112 = vrot.slane %v111, 1
    %v113 = vadd.f32 %v111, %v112
    %v114 = vsel %vm68, %v65, 0.0
    %v115 = vsel %vm68, %v66, 0.0
    %v116 = vadd.f32 %v114, %v115
    %v117 = vsel %vm72, %v67, 0.0
    %v118 = vadd.f32 %v116, %v117
    %v119 = vrot.slane %v118, 4
    %v120 = vadd.f32 %v118, %v119
    %v121 = vrot.slane %v120, 2
    %v122 = vadd.f32 %v120, %v121
    %v123 = vrot.slane %v122, 1
    %v124 = vadd.f32 %v122, %v123
    %vm130 = vcmask 1041409
    %v131 = vsel %vm130, %v91, %v80
    %vm132 = vcmask 1042434
    %v133 = vsel %vm132, %v102, %v131
    %vm134 = vcmask 1043459
    %v135 = vsel %vm134, %v113, %v133
    %vm136 = vcmask 1044484
    %v137 = vsel %vm136, %v124, %v135
    %v139 = vadd.f32 %v52, %v137
    %vm140 = vcmask 258048
    %141 = vst.msk [vmem:[#allocation2] sm:$0x1f] %vm140, %v139
    // Predicated region
    $region26: #{tpu_custom_call.1} parent=1 // pred_check
      %p142 = pneg %p46
    $region27: #{tpu_custom_call.1} parent=1 // pred_check_branch
      %144 = sbr.rel (%p142) target = $region29
    $region28: #{tpu_custom_call.1} parent=1 // pred_region
      %v145 = vld [vmem:[#allocation2] sm:$0x1f]
      %v146 = vld [vmem:[#allocation5] sm:$0xff]
      %v147 = vld [vmem:[#allocation5 + $0x8] sm:$0xff]
      %v148 = vld [vmem:[#allocation5 + $0x10] sm:$0xff]
      %v149 = vld [vmem:[#allocation5 + $0x18] sm:$0xff]
      %v150 = vld [vmem:[%s2] sm:$0x1]
      %v152 = vperm.slane %v150, 0
      %v155 = vsel %vm68, %v145, 0
      %157 = vmatpush.msra.mxu0 0.0
      %158 = vmatpush.msra.mxu0 0.0
      %159 = vmatpush.msra.mxu0 0.0
      %160 = vmatpush.msra.mxu0 0.0
      %161 = vmatpush.msra.mxu0 0.0
      %162 = vmatpush.msra.mxu0 0.0
      %163 = vmatpush.msra.mxu0 0.0
      %164 = vmatpush.msra.mxu0 0.0
      %165 = vmatpush.msra.mxu0 0.0
      %166 = vmatpush.msra.mxu0 0.0
      %167 = vmatpush.msra.mxu0 0.0
      %168 = vmatpush.msra.mxu0 0.0
      %169 = vmatpush.msra.mxu0 %v149
      %170 = vmatpush.msra.mxu0 %v148
      %171 = vmatpush.msra.mxu0 %v147
      %172 = vmatpush.msra.mxu0 %v146
      %173 = vmatmul.f32.gmra.mxu0 %v155
      %v174 = vpop.f32.mrf.mxu0
      %v175 = vadd.f32 %v152, %v174
      %176 = vdwg.mxu0
      %177 = vst [vmem:[%s3] sm:$0x1f] %v175
    $region29: #{tpu_custom_call.1} parent=1 // pred_fallthru
      _
    // Predicated region
    $region30: #{tpu_custom_call.1} parent=1 // pred_check
      _
    $region31: #{tpu_custom_call.1} parent=1 // pred_check_branch
      %179 = sbr.rel (0) target = $region33
    $region32: #{tpu_custom_call.1} parent=1 // pred_region
      _
    $region33: #{tpu_custom_call.1} parent=1 // pred_fallthru
      _
    // Predicated region
    $region34: #{tpu_custom_call.1} parent=1 // pred_check
      _
    $region35: #{tpu_custom_call.1} parent=1 // pred_check_branch
      %181 = sbr.rel (0) target = $region37
    $region36: #{tpu_custom_call.1} parent=1 // pred_region
      _
    $region37: #{tpu_custom_call.1} parent=1 // pred_fallthru
      _
    %182 = vsyncpa [#allocation4], 1
    %183 = vsyncpa [#allocation6], 1

</llo_original>
